<compile_context>
chip_gen: v7x
topology: tpu7x:2x2x1
jax: 0.10.0
libtpu: 0.0.40
codegen_flags: <defaults>
</compile_context>

<pallas_src>
import functools

import jax
import jax.numpy as jnp
from jax.experimental import pallas as pl
from jax.experimental.pallas import tpu as pltpu


def _series_decomp_kernel(x_ref, res_ref, mean_ref, xpad_ref, *,
                          kernel_size, pad, seq_len, n_acc):
    L = seq_len
    tc = x_ref.shape[-1]
    x = x_ref[...]                                   # (1, L, TC), I/O dtype

    # Build the replicate-padded series once, entirely in VMEM scratch.
    xpad_ref[:, pad:pad + L, :] = x
    if pad > 0:
        xpad_ref[:, :pad, :] = jnp.broadcast_to(x[:, 0:1, :], (1, pad, tc))
        xpad_ref[:, pad + L:, :] = jnp.broadcast_to(x[:, L - 1:L, :], (1, pad, tc))

    # Sliding-window sum: k static shifted VMEM loads, accumulated into n_acc
    # independent f32 partial sums to break the dependent-add chain (VPU ILP).
    accs = [jnp.zeros((1, L, tc), jnp.float32) for _ in range(n_acc)]
    for i in range(kernel_size):
        accs[i % n_acc] = accs[i % n_acc] + xpad_ref[:, pl.ds(i, L), :].astype(jnp.float32)
    acc = accs[0]
    for a in accs[1:]:
        acc = acc + a

    mean = (acc * (1.0 / kernel_size)).astype(mean_ref.dtype)
    mean_ref[...] = mean
    # Subtract in the I/O dtype, like PyTorch's `x - moving_mean`.
    res_ref[...] = (x - mean.astype(x.dtype)).astype(res_ref.dtype)


def _choose_channel_tile(C, L, Lp, itemsize, n_acc, budget_bytes=10 << 20):
    """Largest channel tile that keeps the per-step VMEM footprint bounded."""
    # Rough per-channel bytes: double-buffered input block (x2), two
    # double-buffered output blocks (x4), padded scratch, f32 accumulators.
    per_c = (6 * L + Lp) * itemsize + (n_acc + 2) * L * 4
    max_tc = max(1, budget_bytes // per_c)
    if C <= max_tc:
        return C
    # Prefer a multiple of 128 that divides C (lane-dense blocks, no ragged edge).
    tc = (max_tc // 128) * 128
    while tc >= 128:
        if C % tc == 0:
            return tc
        tc -= 128
    return C  # cannot tile C evenly -> fall back to full C


def series_decomp(x, kernel_size):
    """x: (B, L, C). Returns (res, moving_mean), both (B, L, C)."""
    assert kernel_size >= 1 and kernel_size % 2 == 1, \
        "Autoformer series_decomp uses an odd kernel_size"
    B, L, C = x.shape
    pad = (kernel_size - 1) // 2
    Lp = L + 2 * pad
    n_acc = max(1, min(4, kernel_size))
    itemsize = jnp.dtype(x.dtype).itemsize
    TC = _choose_channel_tile(C, L, Lp, itemsize, n_acc)
    n_c = pl.cdiv(C, TC)

    kernel = functools.partial(
        _series_decomp_kernel,
        kernel_size=kernel_size, pad=pad, seq_len=L, n_acc=n_acc)

    out_shapes = (
        jax.ShapeDtypeStruct((B, L, C), x.dtype),   # res
        jax.ShapeDtypeStruct((B, L, C), x.dtype),   # moving_mean
    )

    res, mean = pl.pallas_call(
        kernel,
        out_shape=out_shapes,
        grid_spec=pltpu.PrefetchScalarGridSpec(
            num_scalar_prefetch=0,
            grid=(B, n_c),
            in_specs=[pl.BlockSpec((1, L, TC), lambda b, c: (b, 0, c))],
            out_specs=(
                pl.BlockSpec((1, L, TC), lambda b, c: (b, 0, c)),
                pl.BlockSpec((1, L, TC), lambda b, c: (b, 0, c)),
            ),
            scratch_shapes=[pltpu.VMEM((1, Lp, TC), x.dtype)],
        ),
        compiler_params=pltpu.CompilerParams(
            dimension_semantics=("parallel", "parallel"),
            vmem_limit_bytes=32 * 1024 * 1024,
        ),
    )(x)
    return res, mean


def _reference(x, kernel_size):
    pad = (kernel_size - 1) // 2
    front = jnp.repeat(x[:, 0:1, :], pad, axis=1)
    end = jnp.repeat(x[:, -1:, :], pad, axis=1)
    xp = jnp.concatenate([front, x, end], axis=1)
    L = x.shape[1]
    windows = jnp.stack([xp[:, i:i + L, :] for i in range(kernel_size)], axis=0)
    mean = jnp.mean(windows.astype(jnp.float32), axis=0).astype(x.dtype)
    return x - mean, mean


if __name__ == "__main__":
    B, L, C = 2, 16, 8
    kernel_size = 5

    key = jax.random.PRNGKey(0)
    x = jax.random.normal(key, (B, L, C), dtype=jnp.float32)

    res, mean = series_decomp(x, kernel_size)
    res = jax.block_until_ready(res)
    mean = jax.block_until_ready(mean)

    res_ref, mean_ref = _reference(x, kernel_size)
    assert jnp.allclose(mean, mean_ref, atol=1e-5), "mean mismatch"
    assert jnp.allclose(res, res_ref, atol=1e-5), "res mismatch"

    print("KERNEL_OK")
</pallas_src>

<mosaic_0001>
module attributes {stable_mosaic.version = 11 : i64} {
  func.func @_series_decomp_kernel(%arg0: i32, %arg1: i32, %arg2: memref<1x16x8xf32, #tpu.memory_space<vmem>>, %arg3: memref<1x16x8xf32, #tpu.memory_space<vmem>>, %arg4: memref<1x16x8xf32, #tpu.memory_space<vmem>>, %arg5: memref<1x20x8xf32, #tpu.memory_space<vmem>>) attributes {dimension_semantics = [#tpu.dimension_semantics<parallel>, #tpu.dimension_semantics<parallel>], iteration_bounds = array<i64: 2, 1>, scalar_prefetch = 0 : i64, scratch_operands = 1 : i64, tpu.core_type = #tpu.core_type<tc>, window_params = [{transform_indices = @transform_0, window_bounds = array<i64: 1, 16, 8>}, {transform_indices = @transform_1, window_bounds = array<i64: 1, 16, 8>}, {transform_indices = @transform_2, window_bounds = array<i64: 1, 16, 8>}]} {
    %c0 = arith.constant 0 : index
    %c0_0 = arith.constant 0 : index
    %c0_1 = arith.constant 0 : index
    %0 = vector.load %arg2[%c0, %c0_0, %c0_1] : memref<1x16x8xf32, #tpu.memory_space<vmem>>, vector<1x16x8xf32>
    %c0_2 = arith.constant 0 : index
    %c2 = arith.constant 2 : index
    %c0_3 = arith.constant 0 : index
    %1 = vector.load %arg5[%c0_2, %c2, %c0_3] : memref<1x20x8xf32, #tpu.memory_space<vmem>>, vector<1x16x8xf32>
    tpu.vector_store %arg5[%c0_2, %c2, %c0_3], %0 {strides = array<i32>} : memref<1x20x8xf32, #tpu.memory_space<vmem>>, vector<1x16x8xf32>,
    %2 = vector.extract_strided_slice %0 {offsets = [0, 0, 0], sizes = [1, 1, 8], strides = [1, 1, 1]} : vector<1x16x8xf32> to vector<1x1x8xf32>
    %3 = vector.shape_cast %2 : vector<1x1x8xf32> to vector<1x1x8xf32>
    %4 = vector.broadcast %3 : vector<1x1x8xf32> to vector<1x2x8xf32>
    %c0_4 = arith.constant 0 : index
    %c0_5 = arith.constant 0 : index
    %c0_6 = arith.constant 0 : index
    %5 = vector.load %arg5[%c0_4, %c0_5, %c0_6] : memref<1x20x8xf32, #tpu.memory_space<vmem>>, vector<1x2x8xf32>
    tpu.vector_store %arg5[%c0_4, %c0_5, %c0_6], %4 {strides = array<i32>} : memref<1x20x8xf32, #tpu.memory_space<vmem>>, vector<1x2x8xf32>,
    %6 = vector.extract_strided_slice %0 {offsets = [0, 15, 0], sizes = [1, 1, 8], strides = [1, 1, 1]} : vector<1x16x8xf32> to vector<1x1x8xf32>
    %7 = vector.shape_cast %6 : vector<1x1x8xf32> to vector<1x1x8xf32>
    %8 = vector.broadcast %7 : vector<1x1x8xf32> to vector<1x2x8xf32>
    %c0_7 = arith.constant 0 : index
    %c18 = arith.constant 18 : index
    %c0_8 = arith.constant 0 : index
    %9 = vector.load %arg5[%c0_7, %c18, %c0_8] : memref<1x20x8xf32, #tpu.memory_space<vmem>>, vector<1x2x8xf32>
    tpu.vector_store %arg5[%c0_7, %c18, %c0_8], %8 {strides = array<i32>} : memref<1x20x8xf32, #tpu.memory_space<vmem>>, vector<1x2x8xf32>,
    %cst = arith.constant 0.000000e+00 : f32
    %10 = vector.broadcast %cst : f32 to vector<1x16x8xf32>
    %cst_9 = arith.constant 0.000000e+00 : f32
    %11 = vector.broadcast %cst_9 : f32 to vector<1x16x8xf32>
    %cst_10 = arith.constant 0.000000e+00 : f32
    %12 = vector.broadcast %cst_10 : f32 to vector<1x16x8xf32>
    %cst_11 = arith.constant 0.000000e+00 : f32
    %13 = vector.broadcast %cst_11 : f32 to vector<1x16x8xf32>
    %c0_12 = arith.constant 0 : index
    %c0_13 = arith.constant 0 : index
    %c0_14 = arith.constant 0 : index
    %14 = vector.load %arg5[%c0_12, %c0_13, %c0_14] : memref<1x20x8xf32, #tpu.memory_space<vmem>>, vector<1x16x8xf32>
    %15 = arith.addf %10, %14 : vector<1x16x8xf32>
    %c0_15 = arith.constant 0 : index
    %c1 = arith.constant 1 : index
    %c0_16 = arith.constant 0 : index
    %16 = vector.load %arg5[%c0_15, %c1, %c0_16] : memref<1x20x8xf32, #tpu.memory_space<vmem>>, vector<1x16x8xf32>
    %17 = arith.addf %11, %16 : vector<1x16x8xf32>
    %c0_17 = arith.constant 0 : index
    %c2_18 = arith.constant 2 : index
    %c0_19 = arith.constant 0 : index
    %18 = vector.load %arg5[%c0_17, %c2_18, %c0_19] : memref<1x20x8xf32, #tpu.memory_space<vmem>>, vector<1x16x8xf32>
    %19 = arith.addf %12, %18 : vector<1x16x8xf32>
    %c0_20 = arith.constant 0 : index
    %c3 = arith.constant 3 : index
    %c0_21 = arith.constant 0 : index
    %20 = vector.load %arg5[%c0_20, %c3, %c0_21] : memref<1x20x8xf32, #tpu.memory_space<vmem>>, vector<1x16x8xf32>
    %21 = arith.addf %13, %20 : vector<1x16x8xf32>
    %c0_22 = arith.constant 0 : index
    %c4 = arith.constant 4 : index
    %c0_23 = arith.constant 0 : index
    %22 = vector.load %arg5[%c0_22, %c4, %c0_23] : memref<1x20x8xf32, #tpu.memory_space<vmem>>, vector<1x16x8xf32>
    %23 = arith.addf %15, %22 : vector<1x16x8xf32>
    %24 = arith.addf %23, %17 : vector<1x16x8xf32>
    %25 = arith.addf %24, %19 : vector<1x16x8xf32>
    %26 = arith.addf %25, %21 : vector<1x16x8xf32>
    %cst_24 = arith.constant 2.000000e-01 : f32
    %27 = vector.broadcast %cst_24 : f32 to vector<1x16x8xf32>
    %28 = arith.mulf %26, %27 : vector<1x16x8xf32>
    %c0_25 = arith.constant 0 : index
    %c0_26 = arith.constant 0 : index
    %c0_27 = arith.constant 0 : index
    %29 = vector.load %arg4[%c0_25, %c0_26, %c0_27] : memref<1x16x8xf32, #tpu.memory_space<vmem>>, vector<1x16x8xf32>
    tpu.vector_store %arg4[%c0_25, %c0_26, %c0_27], %28 {strides = array<i32>} : memref<1x16x8xf32, #tpu.memory_space<vmem>>, vector<1x16x8xf32>,
    %30 = arith.subf %0, %28 : vector<1x16x8xf32>
    %c0_28 = arith.constant 0 : index
    %c0_29 = arith.constant 0 : index
    %c0_30 = arith.constant 0 : index
    %31 = vector.load %arg3[%c0_28, %c0_29, %c0_30] : memref<1x16x8xf32, #tpu.memory_space<vmem>>, vector<1x16x8xf32>
    tpu.vector_store %arg3[%c0_28, %c0_29, %c0_30], %30 {strides = array<i32>} : memref<1x16x8xf32, #tpu.memory_space<vmem>>, vector<1x16x8xf32>,
    return
  }
  func.func @transform_0(%arg0: i32, %arg1: i32) -> (i32, i32, i32) {
    %c0_i32 = arith.constant 0 : i32
    %c0_i32_0 = arith.constant 0 : i32
    return %arg0, %c0_i32, %arg1 : i32, i32, i32
  }
  func.func @transform_1(%arg0: i32, %arg1: i32) -> (i32, i32, i32) {
    %c0_i32 = arith.constant 0 : i32
    %c0_i32_0 = arith.constant 0 : i32
    return %arg0, %c0_i32, %arg1 : i32, i32, i32
  }
  func.func @transform_2(%arg0: i32, %arg1: i32) -> (i32, i32, i32) {
    %c0_i32 = arith.constant 0 : i32
    %c0_i32_0 = arith.constant 0 : i32
    return %arg0, %c0_i32, %arg1 : i32, i32, i32
  }
}

</mosaic_0001>

<llo_original>
// kernel: tpu_custom_call.1
$region0: #{tpu_custom_call.1}
  #allocation0 [shape = 'u32[]', space=smem, size = 0x4, offset = 0x4, fixed_abs, tag = 'smem constant byte address 0x4 - core index']
  #allocation1 [shape = 'u32[144,128]{1,0:T(1,128)}', space=vmem, size = 0x12000, scoped, tag = 'internal scratch']
  #allocation2 [shape = 'f32[1,20,8]{2,1,0:T(8,128)}', space=vmem, size = 0x3000, scoped, tag = 'scratch operand']
  %s0 = inlined_call_operand.vmem [shape: f32[2,16,8], index: 0, kind: input, shape index: {}]
  %s1 = inlined_call_operand.vmem [shape: f32[2,16,8], index: 1, kind: output, shape index: {0}]
  %s2 = inlined_call_operand.vmem [shape: f32[2,16,8], index: 2, kind: output, shape index: {1}]
  %3 = xla_tuple %s1, %s2
  %s4 = sld [smem:[#allocation0]]
  $region45: #{tpu_custom_call.1} parent=0
    _
  %s6 = ssub.s32 1, %s4
  %s7 = scalar_select 0, %s6, %s4
  loop: start=0, step=1, limit=4
  $region2: #{tpu_custom_call.1} parent=0 // loop_pre_header
    _
  $region3: #{tpu_custom_call.1} parent=0 // loop_header
    %s9 = sphi 0, %s13
    %p10 = scmp.ge.s32.totalorder %s9, 4
    %s16 = sphi 0, %s28
    %s17 = sphi 0, %s24
    %s18 = sphi 0, %s16
    %s19 = sphi 0, %s17
    %s20 = sphi 0, %s18
    %s21 = sphi 0, %s19
    %s33 = sphi 0, %s35
    %s36 = sphi 0, %s33
    %s37 = sphi 0, %s36
    %s53 = sphi 0, %s37
    %s61 = sphi 0, %s63
    %s64 = sphi 0, %s61
    %s65 = sphi 0, %s64
    %s81 = sphi 0, %s65
    %s89 = sphi 0, %s91
    %s92 = sphi 0, %s89
    %s93 = sphi 0, %s92
    %s109 = sphi 0, %s93
  $region4: #{tpu_custom_call.1} parent=0 // loop_header_branch
    %12 = sbr.rel (%p10) target = $region8
  $region5: #{tpu_custom_call.1} parent=0 // loop_body
    %s14 = ssub.s32 %s9, 1
    %s15 = ssub.s32 %s9, 2
    %s22 = sadd.s32 1, %s17
    %p23 = scmp.ge.s32.totalorder %s22, 1
    %s24 = scalar_select %p23, 0, %s22
    %s25 = sadd.s32 1, %s16
    %s26 = scalar_select %p23, %s25, %s16
    %p27 = scmp.ge.s32.totalorder %s26, 2
    %s28 = scalar_select %p27, 0, %s26
    %s29 = ssub.s32 %s16, %s28
    %s30 = ssub.s32 %s17, %s24
    %s31 = sor.u32 %s29, %s30
    %p32 = scmp.eq.s32.totalorder %s31, 0
    %s34 = sadd.s32 %s33, 1
    %s35 = scalar_select %p32, %s33, %s34
    %p38 = pneg %p32
    %p39 = scmp.eq.s32.totalorder %s9, 1
    %p40 = por %p38, %p39
    %p41 = scmp.ne.s32.totalorder %s33, %s36
    %p42 = scmp.eq.s32.totalorder %s9, 0
    %p43 = por %p41, %p42
    %p44 = scmp.ne.s32.totalorder %s33, %s36
    %p45 = scmp.eq.s32.totalorder %s14, 1
    %p46 = por %p44, %p45
    %p47 = scmp.ne.s32.totalorder %s36, %s37
    %p48 = scmp.eq.s32.totalorder %s14, 0
    %p49 = por %p47, %p48
    %p50 = scmp.ne.s32.totalorder %s36, %s37
    %p51 = scmp.eq.s32.totalorder %s15, 1
    %p52 = por %p50, %p51
    %p54 = scmp.ne.s32.totalorder %s37, %s53
    %p55 = scmp.eq.s32.totalorder %s15, 0
    %p56 = por %p54, %p55
    %s57 = ssub.s32 %s16, %s28
    %s58 = ssub.s32 %s17, %s24
    %s59 = sor.u32 %s57, %s58
    %p60 = scmp.eq.s32.totalorder %s59, 0
    %s62 = sadd.s32 %s61, 1
    %s63 = scalar_select %p60, %s61, %s62
    %p66 = pneg %p60
    %p67 = scmp.eq.s32.totalorder %s9, 1
    %p68 = por %p66, %p67
    %p69 = scmp.ne.s32.totalorder %s61, %s64
    %p70 = scmp.eq.s32.totalorder %s9, 0
    %p71 = por %p69, %p70
    %p72 = scmp.ne.s32.totalorder %s61, %s64
    %p73 = scmp.eq.s32.totalorder %s14, 1
    %p74 = por %p72, %p73
    %p75 = scmp.ne.s32.totalorder %s64, %s65
    %p76 = scmp.eq.s32.totalorder %s14, 0
    %p77 = por %p75, %p76
    %p78 = scmp.ne.s32.totalorder %s64, %s65
    %p79 = scmp.eq.s32.totalorder %s15, 1
    %p80 = por %p78, %p79
    %p82 = scmp.ne.s32.totalorder %s65, %s81
    %p83 = scmp.eq.s32.totalorder %s15, 0
    %p84 = por %p82, %p83
    %s85 = ssub.s32 %s16, %s28
    %s86 = ssub.s32 %s17, %s24
    %s87 = sor.u32 %s85, %s86
    %p88 = scmp.eq.s32.totalorder %s87, 0
    %s90 = sadd.s32 %s89, 1
    %s91 = scalar_select %p88, %s89, %s90
    %p94 = pneg %p88
    %p95 = scmp.eq.s32.totalorder %s9, 1
    %p96 = por %p94, %p95
    %p97 = scmp.ne.s32.totalorder %s89, %s92
    %p98 = scmp.eq.s32.totalorder %s9, 0
    %p99 = por %p97, %p98
    %p100 = scmp.ne.s32.totalorder %s89, %s92
    %p101 = scmp.eq.s32.totalorder %s14, 1
    %p102 = por %p100, %p101
    %p103 = scmp.ne.s32.totalorder %s92, %s93
    %p104 = scmp.eq.s32.totalorder %s14, 0
    %p105 = por %p103, %p104
    %p106 = scmp.ne.s32.totalorder %s92, %s93
    %p107 = scmp.eq.s32.totalorder %s15, 1
    %p108 = por %p106, %p107
    %p110 = scmp.ne.s32.totalorder %s93, %s109
    %p111 = scmp.eq.s32.totalorder %s15, 0
    %p112 = por %p110, %p111
    %p113 = scmp.le.s32.totalorder 1, %s9
    %p114 = scmp.lt.s32.totalorder %s9, 3
    %p115 = pnand %p113, %p114
    %p116 = pneg %p115
    // Predicated region
    $region9: #{tpu_custom_call.1} parent=5 // pred_check
      _
    $region10: #{tpu_custom_call.1} parent=5 // pred_check_branch
      %118 = sbr.rel (%p115) target = $region12
    $region11: #{tpu_custom_call.1} parent=5 // pred_region
      %s119 = ssub.s32 %s9, 1
    $region12: #{tpu_custom_call.1} parent=5 // pred_fallthru
      _
    %p120 = scmp.lt.s32.totalorder %s9, 2
    // Predicated region
    $region13: #{tpu_custom_call.1} parent=5 // pred_check
      %p121 = pneg %p120
    $region14: #{tpu_custom_call.1} parent=5 // pred_check_branch
      %123 = sbr.rel (%p121) target = $region16
    $region15: #{tpu_custom_call.1} parent=5 // pred_region
      // Predicated region
      $region17: #{tpu_custom_call.1} parent=15 // pred_check
        %p124 = pneg %p43
      $region18: #{tpu_custom_call.1} parent=15 // pred_check_branch
        %126 = sbr.rel (%p124) target = $region20
      $region19: #{tpu_custom_call.1} parent=15 // pred_region
        %p127 = scmp.lt.s32.totalorder %s16, 1
        %s128 = scalar_select %p127, %s16, 1
        %p129 = scmp.lt.s32.totalorder %s17, 0
        %s130 = scalar_select %p129, %s17, 0
        %s131 = smul.addr %s128, 2
        %s132 = sadd.s32 %s130, %s131
        %s133 = smul.addr %s132, 8
        %s134 = scalar_lea.vmem %s0, %s133
      $region20: #{tpu_custom_call.1} parent=15 // pred_fallthru
        _
    $region16: #{tpu_custom_call.1} parent=5 // pred_fallthru
      _
    %p135 = scmp.le.s32.totalorder 1, %s9
    %p136 = scmp.lt.s32.totalorder %s9, 3
    %p137 = pnand %p135, %p136
    %p138 = pneg %p137
    // Predicated region
    $region21: #{tpu_custom_call.1} parent=5 // pred_check
      _
    $region22: #{tpu_custom_call.1} parent=5 // pred_check_branch
      %140 = sbr.rel (%p137) target = $region24
    $region23: #{tpu_custom_call.1} parent=5 // pred_region
      %s141 = ssub.s32 %s9, 1
      %p142 = scmp.lt.s32.totalorder %s18, 1
      %s143 = scalar_select %p142, %s18, 1
      %p144 = scmp.lt.s32.totalorder %s19, 0
      %s145 = scalar_select %p144, %s19, 0
      %s146 = smul.addr %s143, 2
      %s147 = sadd.s32 %s145, %s146
      %s148 = smul.addr %s147, 8
      %s149 = scalar_lea.vmem %s0, %s148
      %p150 = pneg %p49
      %p151 = pneg %p46
      %p152 = pneg %p77
      %p153 = pneg %p74
      %p154 = scmp.lt.s32.totalorder %s18, 1
      %s155 = scalar_select %p154, %s18, 1
      %p156 = scmp.lt.s32.totalorder %s19, 0
      %s157 = scalar_select %p156, %s19, 0
      %s158 = smul.addr %s155, 2
      %s159 = sadd.s32 %s157, %s158
      %s160 = smul.addr %s159, 8
      %s161 = scalar_lea.vmem %s1, %s160
      %p162 = pneg %p105
      %p163 = pneg %p102
      %p164 = scmp.lt.s32.totalorder %s18, 1
      %s165 = scalar_select %p164, %s18, 1
      %p166 = scmp.lt.s32.totalorder %s19, 0
      %s167 = scalar_select %p166, %s19, 0
      %s168 = smul.addr %s165, 2
      %s169 = sadd.s32 %s167, %s168
      %s170 = smul.addr %s169, 8
      %s171 = scalar_lea.vmem %s2, %s170
      %p172 = scmp.lt.s32.totalorder %s18, 1
      %s173 = scalar_select %p172, %s18, 1
      %p174 = scmp.lt.s32.totalorder %s19, 0
      %s175 = scalar_select %p174, %s19, 0
      %s176 = smul.addr %s173, 2
      %s177 = sadd.s32 %s175, %s176
      %s178 = smul.addr %s177, 8
      %s179 = scalar_lea.vmem %s0, %s178
      %p180 = scmp.lt.s32.totalorder %s18, 1
      %s181 = scalar_select %p180, %s18, 1
      %p182 = scmp.lt.s32.totalorder %s19, 0
      %s183 = scalar_select %p182, %s19, 0
      %s184 = smul.addr %s181, 2
      %s185 = sadd.s32 %s183, %s184
      %s186 = smul.addr %s185, 8
      %s187 = scalar_lea.vmem %s1, %s186
      %p188 = scmp.lt.s32.totalorder %s18, 1
      %s189 = scalar_select %p188, %s18, 1
      %p190 = scmp.lt.s32.totalorder %s19, 0
      %s191 = scalar_select %p190, %s19, 0
      %s192 = smul.addr %s189, 2
      %s193 = sadd.s32 %s191, %s192
      %s194 = smul.addr %s193, 8
      %s195 = scalar_lea.vmem %s2, %s194
      %v196 = vld [vmem:[%s179] sm:$0xff]
      %v197 = vld [vmem:[%s179 + $0x8] sm:$0xff]
      %vm198 = vcmask 64512
      %199 = vst.msk [vmem:[#allocation2 + $0x2] sm:$0xff] %vm198, %v196
      %200 = vst.msk [vmem:[#allocation2 + $0xa] sm:$0xff] %vm198, %v197
      %v201 = vlaneseq
      %v202 = vshrl.u32 %v201, 7
      %v203 = vsub.s32 0, %v202
      %v204 = vrot.slane %v196, %v203
      %vm205 = vcmask 58368
      %206 = vst.msk [vmem:[#allocation2] sm:$0x3] %vm205, %v204
      %v207 = vlaneseq
      %v208 = vshrl.u32 %v207, 7
      %v209 = vsub.s32 7, %v208
      %v210 = vrot.slane %v197, %v209
      %211 = vst.msk [vmem:[#allocation2 + $0x12] sm:$0x3] %vm205, %v210
      %v212 = vld [vmem:[#allocation2] sm:$0xff]
      %v213 = vld [vmem:[#allocation2 + $0x8] sm:$0xff]
      %v214 = vadd.f32 %v212, 0.0
      %v215 = vadd.f32 %v213, 0.0
      %v216 = vld [vmem:[#allocation2 + $0x1] sm:$0xff]
      %v217 = vld [vmem:[#allocation2 + $0x9] sm:$0xff]
      %v218 = vadd.f32 %v216, 0.0
      %v219 = vadd.f32 %v217, 0.0
      %v220 = vld [vmem:[#allocation2 + $0x2] sm:$0xff]
      %v221 = vld [vmem:[#allocation2 + $0xa] sm:$0xff]
      %v222 = vadd.f32 %v220, 0.0
      %v223 = vadd.f32 %v221, 0.0
      %v224 = vld [vmem:[#allocation2 + $0x3] sm:$0xff]
      %v225 = vld [vmem:[#allocation2 + $0xb] sm:$0xff]
      %v226 = vadd.f32 %v224, 0.0
      %v227 = vadd.f32 %v225, 0.0
      %v228 = vld [vmem:[#allocation2 + $0x4] sm:$0xff]
      %v229 = vld [vmem:[#allocation2 + $0xc] sm:$0xff]
      %v230 = vadd.f32 %v214, %v228
      %v231 = vadd.f32 %v215, %v229
      %v232 = vadd.f32 %v230, %v218
      %v233 = vadd.f32 %v231, %v219
      %v234 = vadd.f32 %v232, %v222
      %v235 = vadd.f32 %v233, %v223
      %v236 = vadd.f32 %v234, %v226
      %v237 = vadd.f32 %v235, %v227
      %v238 = vmul.f32 %v236, 0.2
      %v239 = vmul.f32 %v237, 0.2
      %240 = vst.msk [vmem:[%s195] sm:$0xff] %vm198, %v238
      %241 = vst.msk [vmem:[%s195 + $0x8] sm:$0xff] %vm198, %v239
      %v242 = vsub.f32 %v196, %v238
      %v243 = vsub.f32 %v197, %v239
      %244 = vst.msk [vmem:[%s187] sm:$0xff] %vm198, %v242
      %245 = vst.msk [vmem:[%s187 + $0x8] sm:$0xff] %vm198, %v243
      %p246 = scmp.lt.s32.totalorder %s18, 1
      %s247 = scalar_select %p246, %s18, 1
      %p248 = scmp.lt.s32.totalorder %s19, 0
      %s249 = scalar_select %p248, %s19, 0
      %s250 = smul.addr %s247, 2
      %s251 = sadd.s32 %s249, %s250
      %s252 = smul.addr %s251, 8
      %s253 = scalar_lea.vmem %s1, %s252
      %p254 = scmp.lt.s32.totalorder %s18, 1
      %s255 = scalar_select %p254, %s18, 1
      %p256 = scmp.lt.s32.totalorder %s19, 0
      %s257 = scalar_select %p256, %s19, 0
      %s258 = smul.addr %s255, 2
      %s259 = sadd.s32 %s257, %s258
      %s260 = smul.addr %s259, 8
      %s261 = scalar_lea.vmem %s2, %s260
      // Predicated region
      $region25: #{tpu_custom_call.1} parent=23 // pred_check
        %p262 = pneg %p74
      $region26: #{tpu_custom_call.1} parent=23 // pred_check_branch
        %264 = sbr.rel (%p262) target = $region28
      $region27: #{tpu_custom_call.1} parent=23 // pred_region
        _
      $region28: #{tpu_custom_call.1} parent=23 // pred_fallthru
        _
      // Predicated region
      $region29: #{tpu_custom_call.1} parent=23 // pred_check
        %p265 = pneg %p102
      $region30: #{tpu_custom_call.1} parent=23 // pred_check_branch
        %267 = sbr.rel (%p265) target = $region32
      $region31: #{tpu_custom_call.1} parent=23 // pred_region
        _
      $region32: #{tpu_custom_call.1} parent=23 // pred_fallthru
        _
    $region24: #{tpu_custom_call.1} parent=5 // pred_fallthru
      _
    %p268 = scmp.le.s32.totalorder 2, %s9
    // Predicated region
    $region33: #{tpu_custom_call.1} parent=5 // pred_check
      %p269 = pneg %p268
    $region34: #{tpu_custom_call.1} parent=5 // pred_check_branch
      %271 = sbr.rel (%p269) target = $region36
    $region35: #{tpu_custom_call.1} parent=5 // pred_region
      %s272 = ssub.s32 %s9, 2
      // Predicated region
      $region37: #{tpu_custom_call.1} parent=35 // pred_check
        %p273 = pneg %p80
      $region38: #{tpu_custom_call.1} parent=35 // pred_check_branch
        %275 = sbr.rel (%p273) target = $region40
      $region39: #{tpu_custom_call.1} parent=35 // pred_region
        %p276 = scmp.lt.s32.totalorder %s20, 1
        %s277 = scalar_select %p276, %s20, 1
        %p278 = scmp.lt.s32.totalorder %s21, 0
        %s279 = scalar_select %p278, %s21, 0
        %s280 = smul.addr %s277, 2
        %s281 = sadd.s32 %s279, %s280
        %s282 = smul.addr %s281, 8
        %s283 = scalar_lea.vmem %s1, %s282
      $region40: #{tpu_custom_call.1} parent=35 // pred_fallthru
        _
      // Predicated region
      $region41: #{tpu_custom_call.1} parent=35 // pred_check
        %p284 = pneg %p108
      $region42: #{tpu_custom_call.1} parent=35 // pred_check_branch
        %286 = sbr.rel (%p284) target = $region44
      $region43: #{tpu_custom_call.1} parent=35 // pred_region
        %p287 = scmp.lt.s32.totalorder %s20, 1
        %s288 = scalar_select %p287, %s20, 1
        %p289 = scmp.lt.s32.totalorder %s21, 0
        %s290 = scalar_select %p289, %s21, 0
        %s291 = smul.addr %s288, 2
        %s292 = sadd.s32 %s290, %s291
        %s293 = smul.addr %s292, 8
        %s294 = scalar_lea.vmem %s2, %s293
      $region44: #{tpu_custom_call.1} parent=35 // pred_fallthru
        _
    $region36: #{tpu_custom_call.1} parent=5 // pred_fallthru
      _
  $region6: #{tpu_custom_call.1} parent=0 // loop_footer
    %s13 = sadd.s32 1, %s9
  $region7: #{tpu_custom_call.1} parent=0 // loop_footer_branch
    %8 = sbr.rel target = $region3
  $region8: #{tpu_custom_call.1} parent=0 // loop_exit
    _

</llo_original>
